<compile_context>
chip_gen: v5e
topology: v5e:2x2
jax: 0.10.0
libtpu: 0.0.40
codegen_flags: <defaults>
</compile_context>

<pallas_src>
import functools

import jax
import jax.numpy as jnp
import numpy as np
from jax.experimental import pallas as pl
from jax.experimental.pallas import tpu as pltpu


# ----------------------------------------------------------------------------- kernel
def _smorph_kernel(patch_ref, w_ref, bias_ref, out_ref, *, alpha, f):
    # patch_ref: (P_pad, tm)   w_ref: (4F, 4*P_pad)   bias_ref: (F, 1)   out_ref: (F, tm)
    p = patch_ref[...]                                   # (P_pad, tm) f32
    ap = alpha * p

    # Per-output-column max subtraction; cancels exactly in s10/s11 and s20/s21.
    r1 = jnp.max(ap, axis=0, keepdims=True)              # (1, tm)
    r2 = jnp.max(-ap, axis=0, keepdims=True)             # (1, tm)
    e_p = jnp.exp(ap - r1)                               # (P_pad, tm)
    e_m = jnp.exp(-ap - r2)                              # (P_pad, tm)

    # LHS row blocks: [e_p ; p*e_p ; e_m ; -p*e_m]  -> (4*P_pad, tm), 8-aligned block boundaries.
    lhs = jnp.concatenate([e_p, p * e_p, e_m, -p * e_m], axis=0)

    # One fused MXU matmul: (4F, 4*P_pad) @ (4*P_pad, tm) -> (4F, tm)
    res = jnp.dot(w_ref[...], lhs, preferred_element_type=jnp.float32)

    s11 = res[0 * f:1 * f, :]
    s10 = res[1 * f:2 * f, :]
    s21 = res[2 * f:3 * f, :]
    s20 = res[3 * f:4 * f, :]

    # EUP approximate reciprocal + one Newton-Raphson refinement (full f32 accuracy, tiny cost).
    inv1 = pl.reciprocal(s11, approx=True)
    inv1 = inv1 * (2.0 - s11 * inv1)
    inv2 = pl.reciprocal(s21, approx=True)
    inv2 = inv2 * (2.0 - s21 * inv2)

    y = s10 * inv1 + s20 * inv2
    out_ref[...] = (y + bias_ref[...]).astype(out_ref.dtype)


# ----------------------------------------------------------------------------- glue
def _extract_patches_nchw(x, kh, kw, stride):
    """TF-style extract_image_patches on NCHW input; flattened dim ordered (kh, kw, c)."""
    n, c, h, w = x.shape
    oh = (h - kh) // stride + 1
    ow = (w - kw) // stride + 1
    cols = []
    for i in range(kh):
        for j in range(kw):
            cols.append(x[:, :, i:i + stride * oh:stride, j:j + stride * ow:stride])  # (N,C,OH,OW)
    patches = jnp.stack(cols, axis=1)                    # (N, kh*kw, C, OH, OW)
    patches = patches.reshape(n, kh * kw * c, oh, ow)    # flattened ordering = (kh, kw, c)
    return patches, oh, ow


def smorph_forward(x, k1, k2, bias, *, strides=(1, 1), alpha=1.0, tm=512):
    """x: (N, C, H, W) float32; k1,k2: (kh, kw, C, F); bias: (F,). Returns (N, F, OH, OW)."""
    n, c, h, w = x.shape
    kh, kw, c_in, f = k1.shape
    assert c_in == c
    stride = strides[0]
    oh = (h - kh) // stride + 1
    ow = (w - kw) // stride + 1
    p_dim = kh * kw * c
    m = n * oh * ow

    # --- patch extraction (plain-JAX glue), laid out transposed as a (P, M) slab -------------
    # TODO(synk): for large H/W/C, fold patch extraction into the kernel (overlapping BlockSpec
    #             windows / manual DMA) to avoid the kh*kw-duplicated patch tensor in HBM.
    cols = []
    for i in range(kh):
        for j in range(kw):
            cols.append(x[:, :, i:i + stride * oh:stride, j:j + stride * ow:stride])  # (N,C,OH,OW)
    patches = jnp.stack(cols, axis=0)                    # (kh*kw, N, C, OH, OW)
    patches = jnp.transpose(patches, (0, 2, 1, 3, 4))    # (kh*kw, C, N, OH, OW)
    patches_t = patches.reshape(p_dim, m).astype(jnp.float32)   # (P, M), P ordered (kh, kw, c)

    # --- tiling: pad P to a sublane multiple, M to a multiple of the row tile ------------------
    p_pad = ((p_dim + 7) // 8) * 8
    m128 = pl.cdiv(m, 128) * 128
    tm = max(128, (min(tm, m128) // 128) * 128)
    if m128 // tm < 2 and m128 >= 256:
        tm = max(128, ((m128 // 2) // 128) * 128)        # keep >=2 grid steps (v7x dual TC)
    m_pad = pl.cdiv(m, tm) * tm
    patches_t = jnp.pad(patches_t, ((0, p_pad - p_dim), (0, m_pad - m)))

    # --- hoist all k-side work: one block-structured constant LHS-of-dot, built once -----------
    k1f = k1.reshape(p_dim, f).astype(jnp.float32)       # row-major == torch .view(P, F)
    k2f = k2.reshape(p_dim, f).astype(jnp.float32)
    ek1 = jnp.exp(alpha * k1f)                           # (P, F)
    ek2 = jnp.exp(alpha * k2f)
    w_blocks = jnp.zeros((4 * f, 4 * p_pad), jnp.float32)
    w_blocks = w_blocks.at[0 * f:1 * f, 0 * p_pad:0 * p_pad + p_dim].set(ek1.T)
    w_blocks = w_blocks.at[1 * f:2 * f, 0 * p_pad:0 * p_pad + p_dim].set((k1f * ek1).T)
    w_blocks = w_blocks.at[1 * f:2 * f, 1 * p_pad:1 * p_pad + p_dim].set(ek1.T)
    w_blocks = w_blocks.at[2 * f:3 * f, 2 * p_pad:2 * p_pad + p_dim].set(ek2.T)
    w_blocks = w_blocks.at[3 * f:4 * f, 2 * p_pad:2 * p_pad + p_dim].set((k2f * ek2).T)
    w_blocks = w_blocks.at[3 * f:4 * f, 3 * p_pad:3 * p_pad + p_dim].set(ek2.T)

    bias2d = bias.reshape(f, 1).astype(jnp.float32)

    kernel = functools.partial(_smorph_kernel, alpha=float(alpha), f=f)

    out_t = pl.pallas_call(
        kernel,
        out_shape=jax.ShapeDtypeStruct((f, m_pad), jnp.float32),
        grid_spec=pltpu.PrefetchScalarGridSpec(
            num_scalar_prefetch=0,
            grid=(m_pad // tm,),
            in_specs=[
                pl.BlockSpec((p_pad, tm), lambda i: (0, i)),          # patches (P, M) tile
                pl.BlockSpec((4 * f, 4 * p_pad), lambda i: (0, 0)),   # constant k-side matrix
                pl.BlockSpec((f, 1), lambda i: (0, 0)),               # bias
            ],
            out_specs=pl.BlockSpec((f, tm), lambda i: (0, i)),        # lane-dense (F, M) output
        ),
        compiler_params=pltpu.CompilerParams(
            dimension_semantics=("parallel",),
            vmem_limit_bytes=32 * 1024 * 1024,
        ),
    )(patches_t, w_blocks, bias2d)

    out = out_t[:, :m].reshape(f, n, oh, ow)
    return jnp.transpose(out, (1, 0, 2, 3))              # NCHW: (N, F, OH, OW)


# ----------------------------------------------------------------------------- reference (pure JAX)
def smorph_reference(x, k1, k2, bias, *, strides=(1, 1), alpha=1.0):
    kh, kw, c, f = k1.shape
    patches, oh, ow = _extract_patches_nchw(x, kh, kw, strides[0])    # (N, P, OH, OW)
    p = patches[:, :, None, :, :]                                     # (N, P, 1, OH, OW)
    k1f = k1.reshape(kh * kw * c, f)[None, :, :, None, None]
    k2f = k2.reshape(kh * kw * c, f)[None, :, :, None, None]
    x1 = p + k1f
    x2 = -p + k2f
    e1 = jnp.exp(alpha * x1)
    y11 = jnp.sum(x1 * e1, axis=1) / jnp.sum(e1, axis=1)
    e2 = jnp.exp(alpha * x2)
    y22 = jnp.sum(x2 * e2, axis=1) / jnp.sum(e2, axis=1)
    return y11 + y22 + bias[None, :, None, None]


# ----------------------------------------------------------------------------- main
if __name__ == "__main__":
    # Module config: filters=8, input_shape=(C,H,W)=(4,16,16), kernel_size=(3,3),
    # padding='VALID', strides=(1,1), alpha=1.
    N, C, H, W = 2, 4, 16, 16
    KH, KW, F = 3, 3, 8
    ALPHA = 1.0

    key = jax.random.PRNGKey(0)
    kx, kk1, kk2 = jax.random.split(key, 3)

    x = jax.random.normal(kx, (N, C, H, W), dtype=jnp.float32)

    # Deterministic Xavier-uniform-style init for k1/k2 (shape = (kh, kw, C, F)); bias zeros.
    fan_in = KH * KW * C
    fan_out = F
    bound = float(np.sqrt(6.0 / (fan_in + fan_out)))
    k1 = jax.random.uniform(kk1, (KH, KW, C, F), minval=-bound, maxval=bound, dtype=jnp.float32)
    k2 = jax.random.uniform(kk2, (KH, KW, C, F), minval=-bound, maxval=bound, dtype=jnp.float32)
    bias = jnp.zeros((F,), dtype=jnp.float32)

    y = smorph_forward(x, k1, k2, bias, strides=(1, 1), alpha=ALPHA)
    y = jax.block_until_ready(y)

    y_ref = smorph_reference(x, k1, k2, bias, strides=(1, 1), alpha=ALPHA)
    # Tolerance accounts for the factorized-exp reassociation (tiny) and f32 accumulation order.
    np.testing.assert_allclose(np.asarray(y), np.asarray(y_ref), rtol=5e-3, atol=5e-3)
    assert y.shape == (N, F, H - KH + 1, W - KW + 1)

    print("KERNEL_OK")
</pallas_src>

<mosaic_0001>
module attributes {stable_mosaic.version = 11 : i64} {
  func.func @_smorph_kernel(%arg0: i32, %arg1: memref<40x256xf32, #tpu.memory_space<vmem>>, %arg2: memref<32x160xf32, #tpu.memory_space<vmem>>, %arg3: memref<8x1xf32, #tpu.memory_space<vmem>>, %arg4: memref<8x256xf32, #tpu.memory_space<vmem>>) attributes {dimension_semantics = [#tpu.dimension_semantics<parallel>], iteration_bounds = array<i64: 2>, scalar_prefetch = 0 : i64, scratch_operands = 0 : i64, tpu.core_type = #tpu.core_type<tc>, window_params = [{transform_indices = @transform_0, window_bounds = array<i64: 40, 256>}, {pipeline_mode = #tpu.pipeline_mode<synchronous>, transform_indices = @transform_1, window_bounds = array<i64: 32, 160>}, {pipeline_mode = #tpu.pipeline_mode<synchronous>, transform_indices = @transform_2, window_bounds = array<i64: 8, 1>}, {transform_indices = @transform_3, window_bounds = array<i64: 8, 256>}]} {
    %c0 = arith.constant 0 : index
    %c0_0 = arith.constant 0 : index
    %0 = vector.load %arg1[%c0, %c0_0] : memref<40x256xf32, #tpu.memory_space<vmem>>, vector<40x256xf32>
    %cst = arith.constant 1.000000e+00 : f32
    %1 = vector.broadcast %cst : f32 to vector<40x256xf32>
    %2 = arith.mulf %1, %0 : vector<40x256xf32>
    %cst_1 = arith.constant dense<0xFF800000> : vector<256xf32>
    %3 = vector.multi_reduction <maximumf>, %2, %cst_1 [0] : vector<40x256xf32> to vector<256xf32>
    %4 = vector.shape_cast %3 : vector<256xf32> to vector<1x256xf32>
    %cst_2 = arith.constant 0.000000e+00 : f32
    %5 = vector.broadcast %cst_2 : f32 to vector<40x256xf32>
    %6 = arith.subf %5, %2 : vector<40x256xf32>
    %cst_3 = arith.constant dense<0xFF800000> : vector<256xf32>
    %7 = vector.multi_reduction <maximumf>, %6, %cst_3 [0] : vector<40x256xf32> to vector<256xf32>
    %8 = vector.shape_cast %7 : vector<256xf32> to vector<1x256xf32>
    %9 = vector.broadcast %4 : vector<1x256xf32> to vector<40x256xf32>
    %10 = arith.subf %2, %9 : vector<40x256xf32>
    %11 = math.exp %10 : vector<40x256xf32>
    %cst_4 = arith.constant 0.000000e+00 : f32
    %12 = vector.broadcast %cst_4 : f32 to vector<40x256xf32>
    %13 = arith.subf %12, %2 : vector<40x256xf32>
    %14 = vector.broadcast %8 : vector<1x256xf32> to vector<40x256xf32>
    %15 = arith.subf %13, %14 : vector<40x256xf32>
    %16 = math.exp %15 : vector<40x256xf32>
    %17 = arith.mulf %0, %11 : vector<40x256xf32>
    %cst_5 = arith.constant 0.000000e+00 : f32
    %18 = vector.broadcast %cst_5 : f32 to vector<40x256xf32>
    %19 = arith.subf %18, %0 : vector<40x256xf32>
    %20 = arith.mulf %19, %16 : vector<40x256xf32>
    %21 = tpu.concatenate %11, %17, %16, %20 in 0 : vector<40x256xf32>, vector<40x256xf32>, vector<40x256xf32>, vector<40x256xf32> -> vector<160x256xf32>
    %c0_6 = arith.constant 0 : index
    %c0_7 = arith.constant 0 : index
    %22 = vector.load %arg2[%c0_6, %c0_7] : memref<32x160xf32, #tpu.memory_space<vmem>>, vector<32x160xf32>
    %cst_8 = arith.constant dense<0.000000e+00> : vector<32x256xf32>
    %23 = tpu.matmul %22, %21, %cst_8 {dimension_numbers = #tpu.dot_dimension_numbers<[1], [0], [0], [1], [0, 0, 1, 1], [], []>} : vector<32x160xf32>, vector<160x256xf32>, vector<32x256xf32> -> vector<32x256xf32>
    %24 = vector.extract_strided_slice %23 {offsets = [0, 0], sizes = [8, 256], strides = [1, 1]} : vector<32x256xf32> to vector<8x256xf32>
    %25 = vector.extract_strided_slice %23 {offsets = [8, 0], sizes = [8, 256], strides = [1, 1]} : vector<32x256xf32> to vector<8x256xf32>
    %26 = vector.extract_strided_slice %23 {offsets = [16, 0], sizes = [8, 256], strides = [1, 1]} : vector<32x256xf32> to vector<8x256xf32>
    %27 = vector.extract_strided_slice %23 {offsets = [24, 0], sizes = [8, 256], strides = [1, 1]} : vector<32x256xf32> to vector<8x256xf32>
    %28 = tpu.reciprocal %24 {approx = true} : vector<8x256xf32> -> vector<8x256xf32>
    %29 = arith.mulf %24, %28 : vector<8x256xf32>
    %cst_9 = arith.constant 2.000000e+00 : f32
    %30 = vector.broadcast %cst_9 : f32 to vector<8x256xf32>
    %31 = arith.subf %30, %29 : vector<8x256xf32>
    %32 = arith.mulf %28, %31 : vector<8x256xf32>
    %33 = tpu.reciprocal %26 {approx = true} : vector<8x256xf32> -> vector<8x256xf32>
    %34 = arith.mulf %26, %33 : vector<8x256xf32>
    %cst_10 = arith.constant 2.000000e+00 : f32
    %35 = vector.broadcast %cst_10 : f32 to vector<8x256xf32>
    %36 = arith.subf %35, %34 : vector<8x256xf32>
    %37 = arith.mulf %33, %36 : vector<8x256xf32>
    %38 = arith.mulf %25, %32 : vector<8x256xf32>
    %39 = arith.mulf %27, %37 : vector<8x256xf32>
    %40 = arith.addf %38, %39 : vector<8x256xf32>
    %c0_11 = arith.constant 0 : index
    %c0_12 = arith.constant 0 : index
    %41 = vector.load %arg3[%c0_11, %c0_12] : memref<8x1xf32, #tpu.memory_space<vmem>>, vector<8x1xf32>
    %42 = vector.broadcast %41 : vector<8x1xf32> to vector<8x256xf32>
    %43 = arith.addf %40, %42 : vector<8x256xf32>
    %c0_13 = arith.constant 0 : index
    %c0_14 = arith.constant 0 : index
    %44 = vector.load %arg4[%c0_13, %c0_14] : memref<8x256xf32, #tpu.memory_space<vmem>>, vector<8x256xf32>
    tpu.vector_store %arg4[%c0_13, %c0_14], %43 {strides = array<i32>} : memref<8x256xf32, #tpu.memory_space<vmem>>, vector<8x256xf32>,
    return
  }
  func.func @transform_0(%arg0: i32) -> (i32, i32) {
    %c0_i32 = arith.constant 0 : i32
    %c0_i32_0 = arith.constant 0 : i32
    return %c0_i32, %arg0 : i32, i32
  }
  func.func @transform_1(%arg0: i32) -> (i32, i32) {
    %c0_i32 = arith.constant 0 : i32
    %c0_i32_0 = arith.constant 0 : i32
    %c0_i32_1 = arith.constant 0 : i32
    return %c0_i32, %c0_i32_0 : i32, i32
  }
  func.func @transform_2(%arg0: i32) -> (i32, i32) {
    %c0_i32 = arith.constant 0 : i32
    %c0_i32_0 = arith.constant 0 : i32
    %c0_i32_1 = arith.constant 0 : i32
    return %c0_i32, %c0_i32_0 : i32, i32
  }
  func.func @transform_3(%arg0: i32) -> (i32, i32) {
    %c0_i32 = arith.constant 0 : i32
    %c0_i32_0 = arith.constant 0 : i32
    return %c0_i32, %arg0 : i32, i32
  }
}

</mosaic_0001>

<llo_original>
// kernel: tpu_custom_call.1
$region0: #{tpu_custom_call.1}
  #allocation0 [shape = 'u32[]', space=smem, size = 0x4, offset = 0x4, fixed_abs, tag = 'smem constant byte address 0x4 - core index']
  #allocation1 [shape = 'u32[72,128]{1,0:T(1,128)}', space=vmem, size = 0x9000, scoped, tag = 'internal scratch']
  %s0 = inlined_call_operand.hbm [shape: f32[40,512], index: 0, kind: input, shape index: {}]
  %s1 = inlined_call_operand.hbm [shape: f32[32,160], index: 1, kind: input, shape index: {}]
  %s2 = inlined_call_operand.vmem [shape: f32[8,1], index: 2, kind: input, shape index: {}]
  %s3 = inlined_call_operand.hbm [shape: f32[8,512], index: 3, kind: output, shape index: {}]
  %s4 = sld [smem:[#allocation0]]
  $region53: #{tpu_custom_call.1} parent=0
    _
  %s6 = ssub.s32 1, %s4
  %s7 = scalar_select 0, %s6, %s4
  $region1: #{tpu_custom_call.1} parent=0
    #allocation2 [shape = 'u8[81920]{0}', space=vmem, size = 0x14000, scoped, tag = 'input window, operand 0']
    #allocation3 [shape = 's32[2]{0}', space=sflag, size = 0x8, scoped, tag = 'scoped memory for tpu_custom_call.1']
    #allocation4 [shape = 's32[2]{0}', space=sflag, size = 0x8, scoped, tag = 'scoped memory for tpu_custom_call.1']
    #allocation5 [shape = 'u8[32768]{0}', space=vmem, size = 0x8000, scoped, tag = 'input window, operand 1, single buffered']
    #allocation6 [shape = 's32[1]{0}', space=sflag, size = 0x4, scoped, tag = 'scoped memory for tpu_custom_call.1']
    #allocation7 [shape = 'u8[16384]{0}', space=vmem, size = 0x4000, scoped, tag = 'output window, operand 0']
    %8 = vsyncpa [#allocation3], 0
    %s9 = scalar_lea.sflag [#allocation3], 1
    %10 = vsyncpa %s9, 0
    %11 = vsyncpa [#allocation6], 0
    %12 = vsyncpa [#allocation4], 0
    %s13 = scalar_lea.sflag [#allocation4], 1
    %14 = vsyncpa %s13, 0
    loop: start=0, step=1, limit=4
    $region2: #{tpu_custom_call.1} parent=1 // loop_pre_header
      _
    $region3: #{tpu_custom_call.1} parent=1 // loop_header
      %s16 = sphi 0, %s20
      %p17 = scmp.ge.s32.totalorder %s16, 4
      %s26 = sphi 0, %s28
      %s29 = sphi 0, %s26
      %s30 = sphi 0, %s29
      %s46 = sphi 0, %s30
      %s50 = sphi 0, %s50
      %s52 = sphi 0, %s50
      %s53 = sphi 0, %s52
      %s67 = sphi 0, %s53
      %s71 = sphi 0, %s71
      %s73 = sphi 0, %s71
      %s74 = sphi 0, %s73
      %s88 = sphi 0, %s74
      %s94 = sphi 0, %s96
      %s97 = sphi 0, %s94
      %s98 = sphi 0, %s97
      %s114 = sphi 0, %s98
    $region4: #{tpu_custom_call.1} parent=1 // loop_header_branch
      %19 = sbr.rel (%p17) target = $region8
    $region5: #{tpu_custom_call.1} parent=1 // loop_body
      %s21 = ssub.s32 %s16, 1
      %s22 = ssub.s32 %s16, 2
      %s23 = sadd.s32 %s16, 1
      %s24 = ssub.s32 %s16, %s23
      %p25 = scmp.eq.s32.totalorder %s24, 0
      %s27 = sadd.s32 %s26, 1
      %s28 = scalar_select %p25, %s26, %s27
      %p31 = pneg %p25
      %p32 = scmp.eq.s32.totalorder %s16, 1
      %p33 = por %p31, %p32
      %p34 = scmp.ne.s32.totalorder %s26, %s29
      %p35 = scmp.eq.s32.totalorder %s16, 0
      %p36 = por %p34, %p35
      %p37 = scmp.ne.s32.totalorder %s26, %s29
      %p38 = scmp.eq.s32.totalorder %s21, 1
      %p39 = por %p37, %p38
      %p40 = scmp.ne.s32.totalorder %s29, %s30
      %p41 = scmp.eq.s32.totalorder %s21, 0
      %p42 = por %p40, %p41
      %p43 = scmp.ne.s32.totalorder %s29, %s30
      %p44 = scmp.eq.s32.totalorder %s22, 1
      %p45 = por %p43, %p44
      %p47 = scmp.ne.s32.totalorder %s30, %s46
      %p48 = scmp.eq.s32.totalorder %s22, 0
      %p49 = por %p47, %p48
      %s51 = sadd.s32 %s50, 1
      %p54 = scmp.eq.s32.totalorder %s16, 1
      %p55 = scmp.ne.s32.totalorder %s50, %s52
      %p56 = scmp.eq.s32.totalorder %s16, 0
      %p57 = por %p55, %p56
      %p58 = scmp.ne.s32.totalorder %s50, %s52
      %p59 = scmp.eq.s32.totalorder %s21, 1
      %p60 = por %p58, %p59
      %p61 = scmp.ne.s32.totalorder %s52, %s53
      %p62 = scmp.eq.s32.totalorder %s21, 0
      %p63 = por %p61, %p62
      %p64 = scmp.ne.s32.totalorder %s52, %s53
      %p65 = scmp.eq.s32.totalorder %s22, 1
      %p66 = por %p64, %p65
      %p68 = scmp.ne.s32.totalorder %s53, %s67
      %p69 = scmp.eq.s32.totalorder %s22, 0
      %p70 = por %p68, %p69
      %s72 = sadd.s32 %s71, 1
      %p75 = scmp.eq.s32.totalorder %s16, 1
      %p76 = scmp.ne.s32.totalorder %s71, %s73
      %p77 = scmp.eq.s32.totalorder %s16, 0
      %p78 = por %p76, %p77
      %p79 = scmp.ne.s32.totalorder %s71, %s73
      %p80 = scmp.eq.s32.totalorder %s21, 1
      %p81 = por %p79, %p80
      %p82 = scmp.ne.s32.totalorder %s73, %s74
      %p83 = scmp.eq.s32.totalorder %s21, 0
      %p84 = por %p82, %p83
      %p85 = scmp.ne.s32.totalorder %s73, %s74
      %p86 = scmp.eq.s32.totalorder %s22, 1
      %p87 = por %p85, %p86
      %p89 = scmp.ne.s32.totalorder %s74, %s88
      %p90 = scmp.eq.s32.totalorder %s22, 0
      %p91 = por %p89, %p90
      %s92 = ssub.s32 %s16, %s23
      %p93 = scmp.eq.s32.totalorder %s92, 0
      %s95 = sadd.s32 %s94, 1
      %s96 = scalar_select %p93, %s94, %s95
      %p99 = pneg %p93
      %p100 = scmp.eq.s32.totalorder %s16, 1
      %p101 = por %p99, %p100
      %p102 = scmp.ne.s32.totalorder %s94, %s97
      %p103 = scmp.eq.s32.totalorder %s16, 0
      %p104 = por %p102, %p103
      %p105 = scmp.ne.s32.totalorder %s94, %s97
      %p106 = scmp.eq.s32.totalorder %s21, 1
      %p107 = por %p105, %p106
      %p108 = scmp.ne.s32.totalorder %s97, %s98
      %p109 = scmp.eq.s32.totalorder %s21, 0
      %p110 = por %p108, %p109
      %p111 = scmp.ne.s32.totalorder %s97, %s98
      %p112 = scmp.eq.s32.totalorder %s22, 1
      %p113 = por %p111, %p112
      %p115 = scmp.ne.s32.totalorder %s98, %s114
      %p116 = scmp.eq.s32.totalorder %s22, 0
      %p117 = por %p115, %p116
      %p118 = scmp.le.s32.totalorder 1, %s16
      %p119 = scmp.lt.s32.totalorder %s16, 3
      %p120 = pnand %p118, %p119
      %p121 = pneg %p120
      // Predicated region
      $region9: #{tpu_custom_call.1} parent=5 // pred_check
        _
      $region10: #{tpu_custom_call.1} parent=5 // pred_check_branch
        %123 = sbr.rel (%p120) target = $region12
      $region11: #{tpu_custom_call.1} parent=5 // pred_region
        %s124 = ssub.s32 %s16, 1
        // Predicated region
        $region13: #{tpu_custom_call.1} parent=11 // pred_check
          %p125 = pneg %p63
        $region14: #{tpu_custom_call.1} parent=11 // pred_check_branch
          %127 = sbr.rel (%p125) target = $region16
        $region15: #{tpu_custom_call.1} parent=11 // pred_region
          %129 = vsyncadd [#allocation6], 0
          %s130 = sshll.u32 %s1, 4
          %s131 = int_to_ptr.hbm [resolvable:$true] %s130
          %s132 = sshll.u32 [#allocation5], 4
          %s133 = int_to_ptr.vmem [resolvable:$true] %s132
          %138 = dma.hbm_to_vmem [thread:$0]  %s131, 1024, %s133, [#allocation6], 256, 256, 16
        $region16: #{tpu_custom_call.1} parent=11 // pred_fallthru
          _
        // Predicated region
        $region17: #{tpu_custom_call.1} parent=11 // pred_check
          %p139 = pneg %p84
        $region18: #{tpu_custom_call.1} parent=11 // pred_check_branch
          %141 = sbr.rel (%p139) target = $region20
        $region19: #{tpu_custom_call.1} parent=11 // pred_region
          _
        $region20: #{tpu_custom_call.1} parent=11 // pred_fallthru
          _
      $region12: #{tpu_custom_call.1} parent=5 // pred_fallthru
        _
      %p142 = scmp.lt.s32.totalorder %s16, 2
      // Predicated region
      $region21: #{tpu_custom_call.1} parent=5 // pred_check
        %p143 = pneg %p142
      $region22: #{tpu_custom_call.1} parent=5 // pred_check_branch
        %145 = sbr.rel (%p143) target = $region24
      $region23: #{tpu_custom_call.1} parent=5 // pred_region
        // Predicated region
        $region25: #{tpu_custom_call.1} parent=23 // pred_check
          %p146 = pneg %p36
        $region26: #{tpu_custom_call.1} parent=23 // pred_check_branch
          %148 = sbr.rel (%p146) target = $region28
        $region27: #{tpu_custom_call.1} parent=23 // pred_region
          %s149 = sand.u32 %s26, 1
          %s150 = scalar_lea.sflag [#allocation3], %s149
          %s151 = sand.u32 %s26, 1
          %s152 = smul.addr %s151, 80
          %s153 = scalar_lea.vmem [#allocation2], %s152
          %s154 = smul.u32 2, %s16
          %156 = vsyncadd %s150, 0
          %s157 = smul.addr %s154, 8
          %s158 = scalar_lea.hbm %s0, %s157
          %s159 = sshll.u32 %s158, 4
          %s160 = int_to_ptr.hbm [resolvable:$true] %s159
          %s161 = sshll.u32 %s153, 4
          %s162 = int_to_ptr.vmem [resolvable:$true] %s161
          %167 = dma.hbm_to_vmem [thread:$0]  %s160, 1280, %s162, %s150, 512, 256, 16
        $region28: #{tpu_custom_call.1} parent=23 // pred_fallthru
          _
      $region24: #{tpu_custom_call.1} parent=5 // pred_fallthru
        _
      %p168 = scmp.le.s32.totalorder 1, %s16
      %p169 = scmp.lt.s32.totalorder %s16, 3
      %p170 = pnand %p168, %p169
      %p171 = pneg %p170
      // Predicated region
      $region29: #{tpu_custom_call.1} parent=5 // pred_check
        _
      $region30: #{tpu_custom_call.1} parent=5 // pred_check_branch
        %173 = sbr.rel (%p170) target = $region32
      $region31: #{tpu_custom_call.1} parent=5 // pred_region
        %s174 = ssub.s32 %s16, 1
        %s175 = sand.u32 %s29, 1
        %s176 = scalar_lea.sflag [#allocation3], %s175
        %s177 = sand.u32 %s29, 1
        %s178 = smul.addr %s177, 80
        %s179 = scalar_lea.vmem [#allocation2], %s178
        // Predicated region
        $region33: #{tpu_custom_call.1} parent=31 // pred_check
          %p180 = pneg %p42
        $region34: #{tpu_custom_call.1} parent=31 // pred_check_branch
          %182 = sbr.rel (%p180) target = $region36
        $region35: #{tpu_custom_call.1} parent=31 // pred_region
          %184 = dma.done %s176, 1280
        $region36: #{tpu_custom_call.1} parent=31 // pred_fallthru
          _
        // Predicated region
        $region37: #{tpu_custom_call.1} parent=31 // pred_check
          %p185 = pneg %p63
        $region38: #{tpu_custom_call.1} parent=31 // pred_check_branch
          %187 = sbr.rel (%p185) target = $region40
        $region39: #{tpu_custom_call.1} parent=31 // pred_region
          %189 = dma.done [#allocation6], 1024
        $region40: #{tpu_custom_call.1} parent=31 // pred_fallthru
          _
        %s190 = sand.u32 %s29, 1
        %s191 = scalar_lea.sflag [#allocation3], %s190
        %s192 = sand.u32 %s29, 1
        %s193 = smul.addr %s192, 80
        %s194 = scalar_lea.vmem [#allocation2], %s193
        %p195 = pneg %p42
        %p196 = pneg %p39
        %p197 = pneg %p63
        %p198 = pneg %p60
        %p199 = pneg %p84
        %p200 = pneg %p81
        %p201 = pneg %p110
        %p202 = pneg %p107
        %s203 = sand.u32 %s97, 1
        %s204 = scalar_lea.sflag [#allocation4], %s203
        %s205 = sand.u32 %s97, 1
        %s206 = smul.addr %s205, 16
        %s207 = scalar_lea.vmem [#allocation7], %s206
        %s208 = smul.u32 2, %s21
        %s209 = smul.u32 2, %s21
        %v210 = vld [vmem:[%s179] sm:$0xff]
        %v211 = vld [vmem:[%s179 + $0x8] sm:$0xff]
        %v212 = vld [vmem:[%s179 + $0x10] sm:$0xff]
        %v213 = vld [vmem:[%s179 + $0x18] sm:$0xff]
        %v214 = vld [vmem:[%s179 + $0x20] sm:$0xff]
        %v215 = vld [vmem:[%s179 + $0x28] sm:$0xff]
        %v216 = vld [vmem:[%s179 + $0x30] sm:$0xff]
        %v217 = vld [vmem:[%s179 + $0x38] sm:$0xff]
        %v218 = vld [vmem:[%s179 + $0x40] sm:$0xff]
        %v219 = vld [vmem:[%s179 + $0x48] sm:$0xff]
        %v220 = vmax.f32 %v210, %v214
        %v221 = vmax.f32 %v212, %v216
        %v222 = vmax.f32 %v220, %v218
        %v223 = vmax.f32 %v222, %v221
        %v224 = vrot.slane %v223, 4
        %v225 = vmax.f32 %v223, %v224
        %v226 = vrot.slane %v225, 2
        %v227 = vmax.f32 %v225, %v226
        %v228 = vrot.slane %v227, 1
        %v229 = vmax.f32 %v227, %v228
        %v230 = vmax.f32 %v211, %v215
        %v231 = vmax.f32 %v213, %v217
        %v232 = vmax.f32 %v230, %v219
        %v233 = vmax.f32 %v232, %v231
        %v234 = vrot.slane %v233, 4
        %v235 = vmax.f32 %v233, %v234
        %v236 = vrot.slane %v235, 2
        %v237 = vmax.f32 %v235, %v236
        %v238 = vrot.slane %v237, 1
        %v239 = vmax.f32 %v237, %v238
        %v240 = vsub.f32 0.0, %v210
        %v241 = vsub.f32 0.0, %v211
        %v242 = vsub.f32 0.0, %v212
        %v243 = vsub.f32 0.0, %v213
        %v244 = vsub.f32 0.0, %v214
        %v245 = vsub.f32 0.0, %v215
        %v246 = vsub.f32 0.0, %v216
        %v247 = vsub.f32 0.0, %v217
        %v248 = vsub.f32 0.0, %v218
        %v249 = vsub.f32 0.0, %v219
        %v250 = vmax.f32 %v240, %v244
        %v251 = vmax.f32 %v242, %v246
        %v252 = vmax.f32 %v250, %v248
        %v253 = vmax.f32 %v252, %v251
        %v254 = vrot.slane %v253, 4
        %v255 = vmax.f32 %v253, %v254
        %v256 = vrot.slane %v255, 2
        %v257 = vmax.f32 %v255, %v256
        %v258 = vrot.slane %v257, 1
        %v259 = vmax.f32 %v257, %v258
        %v260 = vmax.f32 %v241, %v245
        %v261 = vmax.f32 %v243, %v247
        %v262 = vmax.f32 %v260, %v249
        %v263 = vmax.f32 %v262, %v261
        %v264 = vrot.slane %v263, 4
        %v265 = vmax.f32 %v263, %v264
        %v266 = vrot.slane %v265, 2
        %v267 = vmax.f32 %v265, %v266
        %v268 = vrot.slane %v267, 1
        %v269 = vmax.f32 %v267, %v268
        %v270 = vsub.f32 %v210, %v229
        %v271 = vsub.f32 %v211, %v239
        %v272 = vsub.f32 %v212, %v229
        %v273 = vsub.f32 %v213, %v239
        %v274 = vsub.f32 %v214, %v229
        %v275 = vsub.f32 %v215, %v239
        %v276 = vsub.f32 %v216, %v229
        %v277 = vsub.f32 %v217, %v239
        %v278 = vsub.f32 %v218, %v229
        %v279 = vsub.f32 %v219, %v239
        %v280 = vmul.f32 %v270, 1.442695
        %v281 = vpow.pop %v280
        %v282 = vmul.f32 %v271, 1.442695
        %v283 = vpow.pop %v282
        %v284 = vmul.f32 %v272, 1.442695
        %v285 = vpow.pop %v284
        %v286 = vmul.f32 %v273, 1.442695
        %v287 = vpow.pop %v286
        %v288 = vmul.f32 %v274, 1.442695
        %v289 = vpow.pop %v288
        %v290 = vmul.f32 %v275, 1.442695
        %v291 = vpow.pop %v290
        %v292 = vmul.f32 %v276, 1.442695
        %v293 = vpow.pop %v292
        %v294 = vmul.f32 %v277, 1.442695
        %v295 = vpow.pop %v294
        %v296 = vmul.f32 %v278, 1.442695
        %v297 = vpow.pop %v296
        %v298 = vmul.f32 %v279, 1.442695
        %v299 = vpow.pop %v298
        %v300 = vsub.f32 %v240, %v259
        %v301 = vsub.f32 %v241, %v269
        %v302 = vsub.f32 %v242, %v259
        %v303 = vsub.f32 %v243, %v269
        %v304 = vsub.f32 %v244, %v259
        %v305 = vsub.f32 %v245, %v269
        %v306 = vsub.f32 %v246, %v259
        %v307 = vsub.f32 %v247, %v269
        %v308 = vsub.f32 %v248, %v259
        %v309 = vsub.f32 %v249, %v269
        %v310 = vmul.f32 %v300, 1.442695
        %v311 = vpow.pop %v310
        %v312 = vmul.f32 %v301, 1.442695
        %v313 = vpow.pop %v312
        %v314 = vmul.f32 %v302, 1.442695
        %v315 = vpow.pop %v314
        %v316 = vmul.f32 %v303, 1.442695
        %v317 = vpow.pop %v316
        %v318 = vmul.f32 %v304, 1.442695
        %v319 = vpow.pop %v318
        %v320 = vmul.f32 %v305, 1.442695
        %v321 = vpow.pop %v320
        %v322 = vmul.f32 %v306, 1.442695
        %v323 = vpow.pop %v322
        %v324 = vmul.f32 %v307, 1.442695
        %v325 = vpow.pop %v324
        %v326 = vmul.f32 %v308, 1.442695
        %v327 = vpow.pop %v326
        %v328 = vmul.f32 %v309, 1.442695
        %v329 = vpow.pop %v328
        %v330 = vmul.f32 %v210, %v281
        %v331 = vmul.f32 %v211, %v283
        %v332 = vmul.f32 %v212, %v285
        %v333 = vmul.f32 %v213, %v287
        %v334 = vmul.f32 %v214, %v289
        %v335 = vmul.f32 %v215, %v291
        %v336 = vmul.f32 %v216, %v293
        %v337 = vmul.f32 %v217, %v295
        %v338 = vmul.f32 %v218, %v297
        %v339 = vmul.f32 %v219, %v299
        %v340 = vmul.f32 %v240, %v311
        %v341 = vmul.f32 %v241, %v313
        %v342 = vmul.f32 %v242, %v315
        %v343 = vmul.f32 %v243, %v317
        %v344 = vmul.f32 %v244, %v319
        %v345 = vmul.f32 %v245, %v321
        %v346 = vmul.f32 %v246, %v323
        %v347 = vmul.f32 %v247, %v325
        %v348 = vmul.f32 %v248, %v327
        %v349 = vmul.f32 %v249, %v329
        %v350 = vld [vmem:[#allocation5] sm:$0xff]
        %v351 = vld [vmem:[#allocation5 + $0x8] sm:$0xff]
        %v352 = vld [vmem:[#allocation5 + $0x10] sm:$0xff]
        %v353 = vld [vmem:[#allocation5 + $0x18] sm:$0xff]
        %v354 = vld [vmem:[#allocation5 + $0x20] sm:$0xff]
        %v355 = vld [vmem:[#allocation5 + $0x28] sm:$0xff]
        %v356 = vld [vmem:[#allocation5 + $0x30] sm:$0xff]
        %v357 = vld [vmem:[#allocation5 + $0x38] sm:$0xff]
        %vm358 = vcmask 261120
        %v360 = vsel %vm358, %v351, 0
        %v363 = vsel %vm358, %v353, 0
        %v366 = vsel %vm358, %v355, 0
        %v369 = vsel %vm358, %v357, 0
        %371 = vmatpush.msra.mxu0 %v340
        %372 = vmatpush.msra.mxu0 %v327
        %373 = vmatpush.msra.mxu0 %v323
        %374 = vmatpush.msra.mxu0 %v319
        %375 = vmatpush.msra.mxu0 %v315
        %376 = vmatpush.msra.mxu0 %v311
        %377 = vmatpush.msra.mxu0 %v338
        %378 = vmatpush.msra.mxu0 %v336
        %379 = vmatpush.msra.mxu0 %v334
        %380 = vmatpush.msra.mxu0 %v332
        %381 = vmatpush.msra.mxu0 %v330
        %382 = vmatpush.msra.mxu0 %v297
        %383 = vmatpush.msra.mxu0 %v293
        %384 = vmatpush.msra.mxu0 %v289
        %385 = vmatpush.msra.mxu0 %v285
        %386 = vmatpush.msra.mxu0 %v281
        %387 = vmatmul.f32.gmra.mxu0 %v350
        %v388 = vpop.f32.mrf.mxu0
        %v389 = vadd.f32 0.0, %v388
        %390 = vmatmul.f32.gmra.mxu0 %v352
        %v391 = vpop.f32.mrf.mxu0
        %v392 = vadd.f32 0.0, %v391
        %393 = vmatmul.f32.gmra.mxu0 %v354
        %v394 = vpop.f32.mrf.mxu0
        %v395 = vadd.f32 0.0, %v394
        %396 = vmatmul.f32.gmra.mxu0 %v356
        %v397 = vpop.f32.mrf.mxu0
        %v398 = vadd.f32 0.0, %v397
        %399 = vdwg.mxu0
        %400 = vmatpush.msra.mxu0 0.0
        %401 = vmatpush.msra.mxu0 0.0
        %402 = vmatpush.msra.mxu0 0.0
        %403 = vmatpush.msra.mxu0 0.0
        %404 = vmatpush.msra.mxu0 0.0
        %405 = vmatpush.msra.mxu0 0.0
        %406 = vmatpush.msra.mxu0 0.0
        %407 = vmatpush.msra.mxu0 0.0
        %408 = vmatpush.msra.mxu0 0.0
        %409 = vmatpush.msra.mxu0 0.0
        %410 = vmatpush.msra.mxu0 0.0
        %411 = vmatpush.msra.mxu0 0.0
        %412 = vmatpush.msra.mxu0 %v348
        %413 = vmatpush.msra.mxu0 %v346
        %414 = vmatpush.msra.mxu0 %v344
        %415 = vmatpush.msra.mxu0 %v342
        %416 = vmatmul.f32.gmra.mxu0 %v360
        %v417 = vpop.f32.mrf.mxu0
        %v418 = vadd.f32 %v389, %v417
        %419 = vmatmul.f32.gmra.mxu0 %v363
        %v420 = vpop.f32.mrf.mxu0
        %v421 = vadd.f32 %v392, %v420
        %422 = vmatmul.f32.gmra.mxu0 %v366
        %v423 = vpop.f32.mrf.mxu0
        %v424 = vadd.f32 %v395, %v423
        %425 = vmatmul.f32.gmra.mxu0 %v369
        %v426 = vpop.f32.mrf.mxu0
        %v427 = vadd.f32 %v398, %v426
        %428 = vdwg.mxu0
        %429 = vmatpush.msra.mxu0 %v341
        %430 = vmatpush.msra.mxu0 %v329
        %431 = vmatpush.msra.mxu0 %v325
        %432 = vmatpush.msra.mxu0 %v321
        %433 = vmatpush.msra.mxu0 %v317
        %434 = vmatpush.msra.mxu0 %v313
        %435 = vmatpush.msra.mxu0 %v339
        %436 = vmatpush.msra.mxu0 %v337
        %437 = vmatpush.msra.mxu0 %v335
        %438 = vmatpush.msra.mxu0 %v333
        %439 = vmatpush.msra.mxu0 %v331
        %440 = vmatpush.msra.mxu0 %v299
        %441 = vmatpush.msra.mxu0 %v295
        %442 = vmatpush.msra.mxu0 %v291
        %443 = vmatpush.msra.mxu0 %v287
        %444 = vmatpush.msra.mxu0 %v283
        %445 = vmatmul.f32.gmra.mxu0 %v350
        %v446 = vpop.f32.mrf.mxu0
        %v447 = vadd.f32 0.0, %v446
        %448 = vmatmul.f32.gmra.mxu0 %v352
        %v449 = vpop.f32.mrf.mxu0
        %v450 = vadd.f32 0.0, %v449
        %451 = vmatmul.f32.gmra.mxu0 %v354
        %v452 = vpop.f32.mrf.mxu0
        %v453 = vadd.f32 0.0, %v452
        %454 = vmatmul.f32.gmra.mxu0 %v356
        %v455 = vpop.f32.mrf.mxu0
        %v456 = vadd.f32 0.0, %v455
        %457 = vdwg.mxu0
        %458 = vmatpush.msra.mxu0 0.0
        %459 = vmatpush.msra.mxu0 0.0
        %460 = vmatpush.msra.mxu0 0.0
        %461 = vmatpush.msra.mxu0 0.0
        %462 = vmatpush.msra.mxu0 0.0
        %463 = vmatpush.msra.mxu0 0.0
        %464 = vmatpush.msra.mxu0 0.0
        %465 = vmatpush.msra.mxu0 0.0
        %466 = vmatpush.msra.mxu0 0.0
        %467 = vmatpush.msra.mxu0 0.0
        %468 = vmatpush.msra.mxu0 0.0
        %469 = vmatpush.msra.mxu0 0.0
        %470 = vmatpush.msra.mxu0 %v349
        %471 = vmatpush.msra.mxu0 %v347
        %472 = vmatpush.msra.mxu0 %v345
        %473 = vmatpush.msra.mxu0 %v343
        %474 = vmatmul.f32.gmra.mxu0 %v360
        %v475 = vpop.f32.mrf.mxu0
        %v476 = vadd.f32 %v447, %v475
        %477 = vmatmul.f32.gmra.mxu0 %v363
        %v478 = vpop.f32.mrf.mxu0
        %v479 = vadd.f32 %v450, %v478
        %480 = vmatmul.f32.gmra.mxu0 %v366
        %v481 = vpop.f32.mrf.mxu0
        %v482 = vadd.f32 %v453, %v481
        %483 = vmatmul.f32.gmra.mxu0 %v369
        %v484 = vpop.f32.mrf.mxu0
        %v485 = vadd.f32 %v456, %v484
        %486 = vdwg.mxu0
        %v487 = vrcp.pop %v418
        %v488 = vrcp.pop %v476
        %v489 = vmul.f32 %v418, %v487
        %v490 = vmul.f32 %v476, %v488
        %v491 = vsub.f32 2.0, %v489
        %v492 = vsub.f32 2.0, %v490
        %v493 = vmul.f32 %v487, %v491
        %v494 = vmul.f32 %v488, %v492
        %v495 = vrcp.pop %v424
        %v496 = vrcp.pop %v482
        %v497 = vmul.f32 %v424, %v495
        %v498 = vmul.f32 %v482, %v496
        %v499 = vsub.f32 2.0, %v497
        %v500 = vsub.f32 2.0, %v498
        %v501 = vmul.f32 %v495, %v499
        %v502 = vmul.f32 %v496, %v500
        %v503 = vmul.f32 %v421, %v493
        %v504 = vmul.f32 %v479, %v494
        %v505 = vmul.f32 %v427, %v501
        %v506 = vmul.f32 %v485, %v502
        %v507 = vadd.f32 %v503, %v505
        %v508 = vadd.f32 %v504, %v506
        %v509 = vld [vmem:[%s2] sm:$0xff]
        %511 = vset.pattern.permute.xlu0 0
        %512 = vperm.xlu0 %511, %v509
        %v513 = vpop.permute.xlu0 %512
        %v515 = vadd.f32 %v507, %v513
        %v516 = vadd.f32 %v508, %v513
        %517 = vst [vmem:[%s207] sm:$0xff] %v515
        %518 = vst [vmem:[%s207 + $0x8] sm:$0xff] %v516
        %s519 = sand.u32 %s97, 1
        %s520 = scalar_lea.sflag [#allocation4], %s519
        %s521 = sand.u32 %s97, 1
        %s522 = smul.addr %s521, 16
        %s523 = scalar_lea.vmem [#allocation7], %s522
        // Predicated region
        $region41: #{tpu_custom_call.1} parent=31 // pred_check
          %p524 = pneg %p107
        $region42: #{tpu_custom_call.1} parent=31 // pred_check_branch
          %526 = sbr.rel (%p524) target = $region44
        $region43: #{tpu_custom_call.1} parent=31 // pred_region
          %s527 = smul.u32 2, %s21
          %529 = vsyncadd %s520, 0
          %s530 = smul.addr %s527, 8
          %s531 = scalar_lea.hbm %s3, %s530
          %s533 = sshll.u32 %s523, 4
          %s534 = int_to_ptr.vmem [resolvable:$true] %s533
          %s535 = sshll.u32 %s531, 4
          %s536 = int_to_ptr.hbm [resolvable:$true] %s535
          %538 = dma.vmem_to_hbm [thread:$0]  %s534, 256, %s536, %s520
        $region44: #{tpu_custom_call.1} parent=31 // pred_fallthru
          _
      $region32: #{tpu_custom_call.1} parent=5 // pred_fallthru
        _
      %p539 = scmp.le.s32.totalorder 2, %s16
      // Predicated region
      $region45: #{tpu_custom_call.1} parent=5 // pred_check
        %p540 = pneg %p539
      $region46: #{tpu_custom_call.1} parent=5 // pred_check_branch
        %542 = sbr.rel (%p540) target = $region48
      $region47: #{tpu_custom_call.1} parent=5 // pred_region
        %s543 = ssub.s32 %s16, 2
        // Predicated region
        $region49: #{tpu_custom_call.1} parent=47 // pred_check
          %p544 = pneg %p113
        $region50: #{tpu_custom_call.1} parent=47 // pred_check_branch
          %546 = sbr.rel (%p544) target = $region52
        $region51: #{tpu_custom_call.1} parent=47 // pred_region
          %s547 = sand.u32 %s98, 1
          %s548 = scalar_lea.sflag [#allocation4], %s547
          %s549 = sand.u32 %s98, 1
          %s550 = smul.addr %s549, 16
          %s551 = scalar_lea.vmem [#allocation7], %s550
          %553 = dma.done %s548, 256
        $region52: #{tpu_custom_call.1} parent=47 // pred_fallthru
          _
      $region48: #{tpu_custom_call.1} parent=5 // pred_fallthru
        _
    $region6: #{tpu_custom_call.1} parent=1 // loop_footer
      %s20 = sadd.s32 1, %s16
    $region7: #{tpu_custom_call.1} parent=1 // loop_footer_branch
      %15 = sbr.rel target = $region3
    $region8: #{tpu_custom_call.1} parent=1 // loop_exit
      _
    %554 = vsyncpa [#allocation3], 1
    %s555 = scalar_lea.sflag [#allocation3], 1
    %556 = vsyncpa %s555, 1
    %557 = vsyncpa [#allocation6], 1
    %558 = vsyncpa [#allocation4], 1
    %s559 = scalar_lea.sflag [#allocation4], 1
    %560 = vsyncpa %s559, 1

</llo_original>
